<compile_context>
chip_gen: v7x
topology: tpu7x:2x2x1
jax: 0.10.0
libtpu: 0.0.40
codegen_flags: <defaults>
</compile_context>

<pallas_src>
import jax
import jax.numpy as jnp
from jax.experimental import pallas as pl
from jax.experimental.pallas import tpu as pltpu


def sphere_pose_kernel(scal_ref, trig_ref, out_ref):
    """One grid step: c2w matrices for a block of poses along the lane axis.

    scal_ref: SMEM (8,)     f32  [radius, c0, c1, c2, mz0, mz1, mz2, 0]
    trig_ref: VMEM (8, TN)  f32  rows 0..3 = cos(a0), sin(a0), cos(a1), sin(a1)
    out_ref : VMEM (16, TN) f32  row k = element (k//4, k%4) of the 4x4 c2w
    """
    r = scal_ref[0]
    c0, c1, c2 = scal_ref[1], scal_ref[2], scal_ref[3]
    mz0, mz1, mz2 = scal_ref[4], scal_ref[5], scal_ref[6]

    ca0 = trig_ref[pl.ds(0, 1), :]
    sa0 = trig_ref[pl.ds(1, 1), :]
    ca1 = trig_ref[pl.ds(2, 1), :]
    sa1 = trig_ref[pl.ds(3, 1), :]

    # z = -[cos(a0)cos(a1), cos(a0)sin(a1), sin(a0)]; normalize (mirrors the
    # module even though z is already unit by the trig identity).
    z0 = -(ca0 * ca1)
    z1 = -(ca0 * sa1)
    z2 = -sa0
    zinv = jax.lax.rsqrt(z0 * z0 + z1 * z1 + z2 * z2)
    z0, z1, z2 = z0 * zinv, z1 * zinv, z2 * zinv

    # t = center - radius * z  (scalar broadcast from SMEM values)
    t0 = c0 - r * z0
    t1 = c1 - r * z1
    t2 = c2 - r * z2

    # x = m_z_world - dot(m_z_world, z) * z; normalize
    # (degenerate like the reference if m_z_world is (anti)parallel to z).
    d = mz0 * z0 + mz1 * z1 + mz2 * z2
    x0 = mz0 - d * z0
    x1 = mz1 - d * z1
    x2 = mz2 - d * z2
    xinv = jax.lax.rsqrt(x0 * x0 + x1 * x1 + x2 * x2)
    x0, x1, x2 = x0 * xinv, x1 * xinv, x2 * xinv

    # y = cross(z, x); normalize
    y0 = z1 * x2 - z2 * x1
    y1 = z2 * x0 - z0 * x2
    y2 = z0 * x1 - z1 * x0
    yinv = jax.lax.rsqrt(y0 * y0 + y1 * y1 + y2 * y2)
    y0, y1, y2 = y0 * yinv, y1 * yinv, y2 * yinv

    tn = out_ref.shape[1]
    zeros = jnp.zeros((1, tn), jnp.float32)
    ones = jnp.ones((1, tn), jnp.float32)
    # c2w row-major: row i = [x_i, y_i, z_i, t_i], row 3 = [0, 0, 0, 1]
    rows = (x0, y0, z0, t0,
            x1, y1, z1, t1,
            x2, y2, z2, t2,
            zeros, zeros, zeros, ones)
    for k, row in enumerate(rows):
        out_ref[pl.ds(k, 1), :] = row


def _round_up(x, m):
    return ((x + m - 1) // m) * m


def _pick_lane_block(npad):
    for tn in (2048, 1024, 512, 256, 128):
        if npad % tn == 0:
            return tn
    return npad  # npad is always a multiple of 128, so this is unreachable


@jax.jit
def sphere_pose_batched(angles, radius, center, m_z_world=None):
    """Batched SpherePose.forward(): angles (N, 2) -> (N, 4, 4) f32 c2w."""
    angles = jnp.asarray(angles, jnp.float32).reshape(-1, 2)
    n = angles.shape[0]
    radius = jnp.asarray(radius, jnp.float32).reshape(-1)[0]
    center = jnp.asarray(center, jnp.float32).reshape(3)
    if m_z_world is None:
        m_z_world = jnp.array([0.0, 0.0, -1.0], jnp.float32)
    m_z_world = jnp.asarray(m_z_world, jnp.float32).reshape(3)

    npad = _round_up(n, 128)
    tn = _pick_lane_block(npad)

    # Hoist the transcendentals into XLA (fuses with the pack); put poses on
    # the 128-lane axis so the kernel is lane-dense.
    ca = jnp.cos(angles)
    sa = jnp.sin(angles)
    trig = jnp.stack([ca[:, 0], sa[:, 0], ca[:, 1], sa[:, 1]], axis=0)  # (4, n)
    trig = jnp.pad(trig, ((0, 4), (0, npad - n)))                       # (8, npad)

    # Pose-independent scalars -> SMEM (read as scalars, splatted on demand).
    scal = jnp.concatenate(
        [radius[None], center, m_z_world, jnp.zeros((1,), jnp.float32)])  # (8,)

    out = pl.pallas_call(
        sphere_pose_kernel,
        out_shape=jax.ShapeDtypeStruct((16, npad), jnp.float32),
        grid=(npad // tn,),
        in_specs=[
            pl.BlockSpec(memory_space=pltpu.MemorySpace.SMEM),
            pl.BlockSpec((8, tn), lambda i: (0, i)),
        ],
        out_specs=pl.BlockSpec((16, tn), lambda i: (0, i)),
        compiler_params=pltpu.CompilerParams(
            dimension_semantics=("parallel",)),
    )(scal, trig)

    # Lane-dense (16, npad) slab -> (N, 4, 4) matrices.
    return out.T[:n].reshape(n, 4, 4)


def sphere_pose_forward(angles, radius, center, m_z_world=None):
    """Module-equivalent forward(): returns a single (4, 4) f32 c2w matrix.

    Note: at batch=1 the Pallas call is launch-overhead-bound; a pure-JAX/XLA
    fusion is cheaper if a Pallas path is not required (kept Pallas-backed
    here so the module forward exercises the kernel).
    """
    angles = jnp.asarray(angles, jnp.float32).reshape(1, 2)
    return sphere_pose_batched(angles, radius, center, m_z_world)[0]


def sphere_pose_reference(angles, radius, center, m_z_world):
    """Pure-JAX reference mirroring the PyTorch forward exactly."""
    a = jnp.asarray(angles, jnp.float32)
    z = -jnp.stack([jnp.cos(a[0]) * jnp.cos(a[1]),
                    jnp.cos(a[0]) * jnp.sin(a[1]),
                    jnp.sin(a[0])], 0)
    z = z / jnp.linalg.norm(z)
    t = (jnp.asarray(center, jnp.float32)
         - jnp.asarray(radius, jnp.float32).reshape(-1)[0] * z)
    mz = jnp.asarray(m_z_world, jnp.float32)
    x = mz - jnp.dot(mz, z) * z
    x = x / jnp.linalg.norm(x)
    y = jnp.cross(z, x)
    y = y / jnp.linalg.norm(y)
    c2w = jnp.stack([x, y, z, t], 1)
    homo = jnp.array([[0.0, 0.0, 0.0, 1.0]], jnp.float32)
    return jnp.concatenate([c2w, homo], 0)


if __name__ == "__main__":
    key = jax.random.PRNGKey(0)
    k_angle, k_center, k_batch = jax.random.split(key, 3)

    # Module "parameters" (deterministic init).
    init_angle = jax.random.uniform(k_angle, (2,), jnp.float32,
                                    minval=-1.0, maxval=1.0)
    radius = jnp.array([1.5], jnp.float32)                    # radius param, shape (1,)
    center = jax.random.normal(k_center, (3,), jnp.float32)   # center param, shape (3,)
    m_z_world = jnp.array([0.0, 0.0, -1.0], jnp.float32)      # fixed buffer

    # 1) Single pose — exact module forward() semantics.
    c2w = jax.block_until_ready(
        sphere_pose_forward(init_angle, radius, center, m_z_world))
    ref = sphere_pose_reference(init_angle, radius, center, m_z_world)
    if not bool(jnp.allclose(c2w, ref, atol=1e-5, rtol=1e-5)):
        raise AssertionError(f"single-pose mismatch:\n{c2w}\nvs reference:\n{ref}")

    # 2) Batched poses on the lane axis (the case the kernel is built for):
    #    300 poses -> padded to 384 lanes -> grid of 3 x 128-lane blocks.
    n_poses = 300
    batch_angles = jax.random.uniform(
        k_batch, (n_poses, 2), jnp.float32, minval=-1.2, maxval=1.2)
    c2w_b = jax.block_until_ready(
        sphere_pose_batched(batch_angles, radius, center, m_z_world))
    ref_b = jax.vmap(
        lambda a: sphere_pose_reference(a, radius, center, m_z_world))(batch_angles)
    if not bool(jnp.allclose(c2w_b, ref_b, atol=1e-5, rtol=1e-5)):
        err = float(jnp.max(jnp.abs(c2w_b - ref_b)))
        raise AssertionError(f"batched mismatch, max abs err = {err}")

    print("KERNEL_OK")
</pallas_src>

<mosaic_0001>
module attributes {stable_mosaic.version = 11 : i64} {
  func.func @sphere_pose_kernel(%arg0: i32, %arg1: memref<8xf32, #tpu.memory_space<smem>>, %arg2: memref<8x128xf32, #tpu.memory_space<vmem>>, %arg3: memref<16x128xf32, #tpu.memory_space<vmem>>) attributes {dimension_semantics = [#tpu.dimension_semantics<parallel>], iteration_bounds = array<i64: 1>, scalar_prefetch = 0 : i64, scratch_operands = 0 : i64, tpu.core_type = #tpu.core_type<tc>, window_params = [{transform_indices = @transform_0, window_bounds = array<i64: 8>}, {transform_indices = @transform_1, window_bounds = array<i64: 8, 128>}, {transform_indices = @transform_2, window_bounds = array<i64: 16, 128>}]} {
    %c0 = arith.constant 0 : index
    %0 = memref.load %arg1[%c0] : memref<8xf32, #tpu.memory_space<smem>>
    %c1 = arith.constant 1 : index
    %1 = memref.load %arg1[%c1] : memref<8xf32, #tpu.memory_space<smem>>
    %c2 = arith.constant 2 : index
    %2 = memref.load %arg1[%c2] : memref<8xf32, #tpu.memory_space<smem>>
    %c3 = arith.constant 3 : index
    %3 = memref.load %arg1[%c3] : memref<8xf32, #tpu.memory_space<smem>>
    %c4 = arith.constant 4 : index
    %4 = memref.load %arg1[%c4] : memref<8xf32, #tpu.memory_space<smem>>
    %c5 = arith.constant 5 : index
    %5 = memref.load %arg1[%c5] : memref<8xf32, #tpu.memory_space<smem>>
    %c6 = arith.constant 6 : index
    %6 = memref.load %arg1[%c6] : memref<8xf32, #tpu.memory_space<smem>>
    %c0_0 = arith.constant 0 : index
    %c0_1 = arith.constant 0 : index
    %7 = vector.load %arg2[%c0_0, %c0_1] : memref<8x128xf32, #tpu.memory_space<vmem>>, vector<1x128xf32>
    %c1_2 = arith.constant 1 : index
    %c0_3 = arith.constant 0 : index
    %8 = vector.load %arg2[%c1_2, %c0_3] : memref<8x128xf32, #tpu.memory_space<vmem>>, vector<1x128xf32>
    %c2_4 = arith.constant 2 : index
    %c0_5 = arith.constant 0 : index
    %9 = vector.load %arg2[%c2_4, %c0_5] : memref<8x128xf32, #tpu.memory_space<vmem>>, vector<1x128xf32>
    %c3_6 = arith.constant 3 : index
    %c0_7 = arith.constant 0 : index
    %10 = vector.load %arg2[%c3_6, %c0_7] : memref<8x128xf32, #tpu.memory_space<vmem>>, vector<1x128xf32>
    %11 = arith.mulf %7, %9 : vector<1x128xf32>
    %cst = arith.constant 0.000000e+00 : f32
    %12 = vector.broadcast %cst : f32 to vector<1x128xf32>
    %13 = arith.subf %12, %11 : vector<1x128xf32>
    %14 = arith.mulf %7, %10 : vector<1x128xf32>
    %cst_8 = arith.constant 0.000000e+00 : f32
    %15 = vector.broadcast %cst_8 : f32 to vector<1x128xf32>
    %16 = arith.subf %15, %14 : vector<1x128xf32>
    %cst_9 = arith.constant 0.000000e+00 : f32
    %17 = vector.broadcast %cst_9 : f32 to vector<1x128xf32>
    %18 = arith.subf %17, %8 : vector<1x128xf32>
    %19 = arith.mulf %13, %13 : vector<1x128xf32>
    %20 = arith.mulf %16, %16 : vector<1x128xf32>
    %21 = arith.addf %19, %20 : vector<1x128xf32>
    %22 = arith.mulf %18, %18 : vector<1x128xf32>
    %23 = arith.addf %21, %22 : vector<1x128xf32>
    %24 = math.rsqrt %23 : vector<1x128xf32>
    %25 = arith.mulf %13, %24 : vector<1x128xf32>
    %26 = arith.mulf %16, %24 : vector<1x128xf32>
    %27 = arith.mulf %18, %24 : vector<1x128xf32>
    %28 = vector.broadcast %0 : f32 to vector<1x128xf32>
    %29 = arith.mulf %28, %25 : vector<1x128xf32>
    %30 = vector.broadcast %1 : f32 to vector<1x128xf32>
    %31 = arith.subf %30, %29 : vector<1x128xf32>
    %32 = vector.broadcast %0 : f32 to vector<1x128xf32>
    %33 = arith.mulf %32, %26 : vector<1x128xf32>
    %34 = vector.broadcast %2 : f32 to vector<1x128xf32>
    %35 = arith.subf %34, %33 : vector<1x128xf32>
    %36 = vector.broadcast %0 : f32 to vector<1x128xf32>
    %37 = arith.mulf %36, %27 : vector<1x128xf32>
    %38 = vector.broadcast %3 : f32 to vector<1x128xf32>
    %39 = arith.subf %38, %37 : vector<1x128xf32>
    %40 = vector.broadcast %4 : f32 to vector<1x128xf32>
    %41 = arith.mulf %40, %25 : vector<1x128xf32>
    %42 = vector.broadcast %5 : f32 to vector<1x128xf32>
    %43 = arith.mulf %42, %26 : vector<1x128xf32>
    %44 = arith.addf %41, %43 : vector<1x128xf32>
    %45 = vector.broadcast %6 : f32 to vector<1x128xf32>
    %46 = arith.mulf %45, %27 : vector<1x128xf32>
    %47 = arith.addf %44, %46 : vector<1x128xf32>
    %48 = arith.mulf %47, %25 : vector<1x128xf32>
    %49 = vector.broadcast %4 : f32 to vector<1x128xf32>
    %50 = arith.subf %49, %48 : vector<1x128xf32>
    %51 = arith.mulf %47, %26 : vector<1x128xf32>
    %52 = vector.broadcast %5 : f32 to vector<1x128xf32>
    %53 = arith.subf %52, %51 : vector<1x128xf32>
    %54 = arith.mulf %47, %27 : vector<1x128xf32>
    %55 = vector.broadcast %6 : f32 to vector<1x128xf32>
    %56 = arith.subf %55, %54 : vector<1x128xf32>
    %57 = arith.mulf %50, %50 : vector<1x128xf32>
    %58 = arith.mulf %53, %53 : vector<1x128xf32>
    %59 = arith.addf %57, %58 : vector<1x128xf32>
    %60 = arith.mulf %56, %56 : vector<1x128xf32>
    %61 = arith.addf %59, %60 : vector<1x128xf32>
    %62 = math.rsqrt %61 : vector<1x128xf32>
    %63 = arith.mulf %50, %62 : vector<1x128xf32>
    %64 = arith.mulf %53, %62 : vector<1x128xf32>
    %65 = arith.mulf %56, %62 : vector<1x128xf32>
    %66 = arith.mulf %26, %65 : vector<1x128xf32>
    %67 = arith.mulf %27, %64 : vector<1x128xf32>
    %68 = arith.subf %66, %67 : vector<1x128xf32>
    %69 = arith.mulf %27, %63 : vector<1x128xf32>
    %70 = arith.mulf %25, %65 : vector<1x128xf32>
    %71 = arith.subf %69, %70 : vector<1x128xf32>
    %72 = arith.mulf %25, %64 : vector<1x128xf32>
    %73 = arith.mulf %26, %63 : vector<1x128xf32>
    %74 = arith.subf %72, %73 : vector<1x128xf32>
    %75 = arith.mulf %68, %68 : vector<1x128xf32>
    %76 = arith.mulf %71, %71 : vector<1x128xf32>
    %77 = arith.addf %75, %76 : vector<1x128xf32>
    %78 = arith.mulf %74, %74 : vector<1x128xf32>
    %79 = arith.addf %77, %78 : vector<1x128xf32>
    %80 = math.rsqrt %79 : vector<1x128xf32>
    %81 = arith.mulf %68, %80 : vector<1x128xf32>
    %82 = arith.mulf %71, %80 : vector<1x128xf32>
    %83 = arith.mulf %74, %80 : vector<1x128xf32>
    %cst_10 = arith.constant 0.000000e+00 : f32
    %84 = vector.broadcast %cst_10 : f32 to vector<1x128xf32>
    %cst_11 = arith.constant 1.000000e+00 : f32
    %85 = vector.broadcast %cst_11 : f32 to vector<1x128xf32>
    %c0_12 = arith.constant 0 : index
    %c0_13 = arith.constant 0 : index
    %86 = vector.load %arg3[%c0_12, %c0_13] : memref<16x128xf32, #tpu.memory_space<vmem>>, vector<1x128xf32>
    tpu.vector_store %arg3[%c0_12, %c0_13], %63 {strides = array<i32>} : memref<16x128xf32, #tpu.memory_space<vmem>>, vector<1x128xf32>,
    %c1_14 = arith.constant 1 : index
    %c0_15 = arith.constant 0 : index
    %87 = vector.load %arg3[%c1_14, %c0_15] : memref<16x128xf32, #tpu.memory_space<vmem>>, vector<1x128xf32>
    tpu.vector_store %arg3[%c1_14, %c0_15], %81 {strides = array<i32>} : memref<16x128xf32, #tpu.memory_space<vmem>>, vector<1x128xf32>,
    %c2_16 = arith.constant 2 : index
    %c0_17 = arith.constant 0 : index
    %88 = vector.load %arg3[%c2_16, %c0_17] : memref<16x128xf32, #tpu.memory_space<vmem>>, vector<1x128xf32>
    tpu.vector_store %arg3[%c2_16, %c0_17], %25 {strides = array<i32>} : memref<16x128xf32, #tpu.memory_space<vmem>>, vector<1x128xf32>,
    %c3_18 = arith.constant 3 : index
    %c0_19 = arith.constant 0 : index
    %89 = vector.load %arg3[%c3_18, %c0_19] : memref<16x128xf32, #tpu.memory_space<vmem>>, vector<1x128xf32>
    tpu.vector_store %arg3[%c3_18, %c0_19], %31 {strides = array<i32>} : memref<16x128xf32, #tpu.memory_space<vmem>>, vector<1x128xf32>,
    %c4_20 = arith.constant 4 : index
    %c0_21 = arith.constant 0 : index
    %90 = vector.load %arg3[%c4_20, %c0_21] : memref<16x128xf32, #tpu.memory_space<vmem>>, vector<1x128xf32>
    tpu.vector_store %arg3[%c4_20, %c0_21], %64 {strides = array<i32>} : memref<16x128xf32, #tpu.memory_space<vmem>>, vector<1x128xf32>,
    %c5_22 = arith.constant 5 : index
    %c0_23 = arith.constant 0 : index
    %91 = vector.load %arg3[%c5_22, %c0_23] : memref<16x128xf32, #tpu.memory_space<vmem>>, vector<1x128xf32>
    tpu.vector_store %arg3[%c5_22, %c0_23], %82 {strides = array<i32>} : memref<16x128xf32, #tpu.memory_space<vmem>>, vector<1x128xf32>,
    %c6_24 = arith.constant 6 : index
    %c0_25 = arith.constant 0 : index
    %92 = vector.load %arg3[%c6_24, %c0_25] : memref<16x128xf32, #tpu.memory_space<vmem>>, vector<1x128xf32>
    tpu.vector_store %arg3[%c6_24, %c0_25], %26 {strides = array<i32>} : memref<16x128xf32, #tpu.memory_space<vmem>>, vector<1x128xf32>,
    %c7 = arith.constant 7 : index
    %c0_26 = arith.constant 0 : index
    %93 = vector.load %arg3[%c7, %c0_26] : memref<16x128xf32, #tpu.memory_space<vmem>>, vector<1x128xf32>
    tpu.vector_store %arg3[%c7, %c0_26], %35 {strides = array<i32>} : memref<16x128xf32, #tpu.memory_space<vmem>>, vector<1x128xf32>,
    %c8 = arith.constant 8 : index
    %c0_27 = arith.constant 0 : index
    %94 = vector.load %arg3[%c8, %c0_27] : memref<16x128xf32, #tpu.memory_space<vmem>>, vector<1x128xf32>
    tpu.vector_store %arg3[%c8, %c0_27], %65 {strides = array<i32>} : memref<16x128xf32, #tpu.memory_space<vmem>>, vector<1x128xf32>,
    %c9 = arith.constant 9 : index
    %c0_28 = arith.constant 0 : index
    %95 = vector.load %arg3[%c9, %c0_28] : memref<16x128xf32, #tpu.memory_space<vmem>>, vector<1x128xf32>
    tpu.vector_store %arg3[%c9, %c0_28], %83 {strides = array<i32>} : memref<16x128xf32, #tpu.memory_space<vmem>>, vector<1x128xf32>,
    %c10 = arith.constant 10 : index
    %c0_29 = arith.constant 0 : index
    %96 = vector.load %arg3[%c10, %c0_29] : memref<16x128xf32, #tpu.memory_space<vmem>>, vector<1x128xf32>
    tpu.vector_store %arg3[%c10, %c0_29], %27 {strides = array<i32>} : memref<16x128xf32, #tpu.memory_space<vmem>>, vector<1x128xf32>,
    %c11 = arith.constant 11 : index
    %c0_30 = arith.constant 0 : index
    %97 = vector.load %arg3[%c11, %c0_30] : memref<16x128xf32, #tpu.memory_space<vmem>>, vector<1x128xf32>
    tpu.vector_store %arg3[%c11, %c0_30], %39 {strides = array<i32>} : memref<16x128xf32, #tpu.memory_space<vmem>>, vector<1x128xf32>,
    %c12 = arith.constant 12 : index
    %c0_31 = arith.constant 0 : index
    %98 = vector.load %arg3[%c12, %c0_31] : memref<16x128xf32, #tpu.memory_space<vmem>>, vector<1x128xf32>
    tpu.vector_store %arg3[%c12, %c0_31], %84 {strides = array<i32>} : memref<16x128xf32, #tpu.memory_space<vmem>>, vector<1x128xf32>,
    %c13 = arith.constant 13 : index
    %c0_32 = arith.constant 0 : index
    %99 = vector.load %arg3[%c13, %c0_32] : memref<16x128xf32, #tpu.memory_space<vmem>>, vector<1x128xf32>
    tpu.vector_store %arg3[%c13, %c0_32], %84 {strides = array<i32>} : memref<16x128xf32, #tpu.memory_space<vmem>>, vector<1x128xf32>,
    %c14 = arith.constant 14 : index
    %c0_33 = arith.constant 0 : index
    %100 = vector.load %arg3[%c14, %c0_33] : memref<16x128xf32, #tpu.memory_space<vmem>>, vector<1x128xf32>
    tpu.vector_store %arg3[%c14, %c0_33], %84 {strides = array<i32>} : memref<16x128xf32, #tpu.memory_space<vmem>>, vector<1x128xf32>,
    %c15 = arith.constant 15 : index
    %c0_34 = arith.constant 0 : index
    %101 = vector.load %arg3[%c15, %c0_34] : memref<16x128xf32, #tpu.memory_space<vmem>>, vector<1x128xf32>
    tpu.vector_store %arg3[%c15, %c0_34], %85 {strides = array<i32>} : memref<16x128xf32, #tpu.memory_space<vmem>>, vector<1x128xf32>,
    return
  }
  func.func @transform_0(%arg0: i32) -> i32 {
    %c0_i32 = arith.constant 0 : i32
    %c0_i32_0 = arith.constant 0 : i32
    return %c0_i32 : i32
  }
  func.func @transform_1(%arg0: i32) -> (i32, i32) {
    %c0_i32 = arith.constant 0 : i32
    %c0_i32_0 = arith.constant 0 : i32
    return %c0_i32, %arg0 : i32, i32
  }
  func.func @transform_2(%arg0: i32) -> (i32, i32) {
    %c0_i32 = arith.constant 0 : i32
    %c0_i32_0 = arith.constant 0 : i32
    return %c0_i32, %arg0 : i32, i32
  }
}

</mosaic_0001>

<llo_original>
// kernel: sphere_pose_batched.1
$region0: #{sphere_pose_batched.1}
  #allocation0 [shape = 'u32[]', space=smem, size = 0x4, offset = 0x4, fixed_abs, tag = 'smem constant byte address 0x4 - core index']
  #allocation1 [shape = 'u32[144,128]{1,0:T(1,128)}', space=vmem, size = 0x12000, scoped, tag = 'internal scratch']
  %s0 = inlined_call_operand.vmem [shape: f32[8], index: 0, kind: input, shape index: {}]
  %s1 = inlined_call_operand.vmem [shape: f32[8,128], index: 1, kind: input, shape index: {}]
  %s2 = inlined_call_operand.vmem [shape: f32[16,128], index: 2, kind: output, shape index: {}]
  %s3 = sld [smem:[#allocation0]]
  $region22: #{sphere_pose_batched.1} parent=0
    _
  %s5 = ssub.s32 1, %s3
  %s6 = scalar_select 0, %s5, %s3
  $region1: #{sphere_pose_batched.1} parent=0
    #allocation2 [shape = 'u8[512]{0}', space=smem, size = 0x200, scoped, tag = 'input window, operand 0, single buffered']
    #allocation3 [shape = 's32[1]{0}', space=sflag, size = 0x4, scoped, tag = 'scoped memory for sphere_pose_batched.1']
    %7 = vsyncpa [#allocation3], 0
    // Predicated region
    $region2: #{sphere_pose_batched.1} parent=1 // pred_check
      _
    $region3: #{sphere_pose_batched.1} parent=1 // pred_check_branch
      %9 = sbr.rel (0) target = $region5
    $region4: #{sphere_pose_batched.1} parent=1 // pred_region
      %s11 = ssub.s32 16, 16
      %12 = vsyncadd [#allocation3], %s11
      %s14 = sshll.u32 %s0, 4
      %s15 = int_to_ptr.vmem [resolvable:$true] %s14
      %17 = dma.vmem_to_smem %s15, 16, [#allocation2], [#allocation3]
    $region5: #{sphere_pose_batched.1} parent=1 // pred_fallthru
      _
    // Predicated region
    $region6: #{sphere_pose_batched.1} parent=1 // pred_check
      _
    $region7: #{sphere_pose_batched.1} parent=1 // pred_check_branch
      %19 = sbr.rel (0) target = $region9
    $region8: #{sphere_pose_batched.1} parent=1 // pred_region
      _
    $region9: #{sphere_pose_batched.1} parent=1 // pred_fallthru
      _
    // Predicated region
    $region10: #{sphere_pose_batched.1} parent=1 // pred_check
      _
    $region11: #{sphere_pose_batched.1} parent=1 // pred_check_branch
      %21 = sbr.rel (0) target = $region13
    $region12: #{sphere_pose_batched.1} parent=1 // pred_region
      %22 = dma.done [#allocation3], 16
    $region13: #{sphere_pose_batched.1} parent=1 // pred_fallthru
      _
    %23 = sfence
    %s24 = sld [smem:[#allocation2]]
    %s25 = sld [smem:[#allocation2 + $0x1]]
    %s26 = sld [smem:[#allocation2 + $0x2]]
    %s27 = sld [smem:[#allocation2 + $0x3]]
    %s28 = sld [smem:[#allocation2 + $0x4]]
    %s29 = sld [smem:[#allocation2 + $0x5]]
    %s30 = sld [smem:[#allocation2 + $0x6]]
    %v31 = vld [vmem:[%s1] sm:$0x1]
    %v32 = vld [vmem:[%s1 + $0x1] sm:$0x1]
    %v33 = vld [vmem:[%s1 + $0x2] sm:$0x1]
    %v34 = vld [vmem:[%s1 + $0x3] sm:$0x1]
    %v35 = vmul.f32 %v31, %v33
    %v36 = vsub.f32 0.0, %v35
    %v37 = vmul.f32 %v31, %v34
    %v38 = vsub.f32 0.0, %v37
    %v39 = vsub.f32 0.0, %v32
    %v40 = vmul.f32 %v36, %v36
    %v41 = vmul.f32 %v38, %v38
    %v42 = vadd.f32 %v40, %v41
    %v43 = vmul.f32 %v39, %v39
    %v44 = vadd.f32 %v42, %v43
    %v45 = vrsqrt.pop %v44
    %v46 = vmul.f32 %v36, %v45
    %v47 = vmul.f32 %v38, %v45
    %v48 = vmul.f32 %v39, %v45
    %v49 = vstv %s24
    %v50 = vmul.f32 %v49, %v46
    %v51 = vstv %s25
    %v52 = vsub.f32 %v51, %v50
    %v53 = vmul.f32 %v49, %v47
    %v54 = vstv %s26
    %v55 = vsub.f32 %v54, %v53
    %v56 = vmul.f32 %v49, %v48
    %v57 = vstv %s27
    %v58 = vsub.f32 %v57, %v56
    %v59 = vstv %s28
    %v60 = vmul.f32 %v59, %v46
    %v61 = vstv %s29
    %v62 = vmul.f32 %v61, %v47
    %v63 = vadd.f32 %v60, %v62
    %v64 = vstv %s30
    %v65 = vmul.f32 %v64, %v48
    %v66 = vadd.f32 %v63, %v65
    %v67 = vmul.f32 %v66, %v46
    %v68 = vsub.f32 %v59, %v67
    %v69 = vmul.f32 %v66, %v47
    %v70 = vsub.f32 %v61, %v69
    %v71 = vmul.f32 %v66, %v48
    %v72 = vsub.f32 %v64, %v71
    %v73 = vmul.f32 %v68, %v68
    %v74 = vmul.f32 %v70, %v70
    %v75 = vadd.f32 %v73, %v74
    %v76 = vmul.f32 %v72, %v72
    %v77 = vadd.f32 %v75, %v76
    %v78 = vrsqrt.pop %v77
    %v79 = vmul.f32 %v68, %v78
    %v80 = vmul.f32 %v70, %v78
    %v81 = vmul.f32 %v72, %v78
    %v82 = vmul.f32 %v47, %v81
    %v83 = vmul.f32 %v48, %v80
    %v84 = vsub.f32 %v82, %v83
    %v85 = vmul.f32 %v48, %v79
    %v86 = vmul.f32 %v46, %v81
    %v87 = vsub.f32 %v85, %v86
    %v88 = vmul.f32 %v46, %v80
    %v89 = vmul.f32 %v47, %v79
    %v90 = vsub.f32 %v88, %v89
    %v91 = vmul.f32 %v84, %v84
    %v92 = vmul.f32 %v87, %v87
    %v93 = vadd.f32 %v91, %v92
    %v94 = vmul.f32 %v90, %v90
    %v95 = vadd.f32 %v93, %v94
    %v96 = vrsqrt.pop %v95
    %v97 = vmul.f32 %v84, %v96
    %v98 = vmul.f32 %v87, %v96
    %v99 = vmul.f32 %v90, %v96
    %100 = vst [vmem:[%s2] sm:$0x1] %v79
    %101 = vst [vmem:[%s2 + $0x1] sm:$0x1] %v97
    %102 = vst [vmem:[%s2 + $0x2] sm:$0x1] %v46
    %103 = vst [vmem:[%s2 + $0x3] sm:$0x1] %v52
    %104 = vst [vmem:[%s2 + $0x4] sm:$0x1] %v80
    %105 = vst [vmem:[%s2 + $0x5] sm:$0x1] %v98
    %106 = vst [vmem:[%s2 + $0x6] sm:$0x1] %v47
    %107 = vst [vmem:[%s2 + $0x7] sm:$0x1] %v55
    %108 = vst [vmem:[%s2 + $0x8] sm:$0x1] %v81
    %109 = vst [vmem:[%s2 + $0x9] sm:$0x1] %v99
    %110 = vst [vmem:[%s2 + $0xa] sm:$0x1] %v48
    %111 = vst [vmem:[%s2 + $0xb] sm:$0x1] %v58
    %112 = vst [vmem:[%s2 + $0xc] sm:$0x1] 0.0
    %113 = vst [vmem:[%s2 + $0xd] sm:$0x1] 0.0
    %114 = vst [vmem:[%s2 + $0xe] sm:$0x1] 0.0
    %115 = vst [vmem:[%s2 + $0xf] sm:$0x1] 1.0
    // Predicated region
    $region14: #{sphere_pose_batched.1} parent=1 // pred_check
      _
    $region15: #{sphere_pose_batched.1} parent=1 // pred_check_branch
      %117 = sbr.rel (0) target = $region17
    $region16: #{sphere_pose_batched.1} parent=1 // pred_region
      _
    $region17: #{sphere_pose_batched.1} parent=1 // pred_fallthru
      _
    // Predicated region
    $region18: #{sphere_pose_batched.1} parent=1 // pred_check
      _
    $region19: #{sphere_pose_batched.1} parent=1 // pred_check_branch
      %119 = sbr.rel (0) target = $region21
    $region20: #{sphere_pose_batched.1} parent=1 // pred_region
      _
    $region21: #{sphere_pose_batched.1} parent=1 // pred_fallthru
      _
    %120 = vsyncpa [#allocation3], 1

</llo_original>
